<compile_context>
chip_gen: v5e
topology: v5e:2x2
jax: 0.10.0
libtpu: 0.0.40
codegen_flags: <defaults>
</compile_context>

<pallas_src>
import jax
import jax.numpy as jnp
from jax.experimental import pallas as pl
from jax.experimental.pallas import tpu as pltpu


def value_net_kernel(x_ref, w1t_ref, b1t_ref, w2t_ref, b2_ref, o_ref):
    # fc1 on the MXU, computed "transposed" so batch sits on lanes:
    #   h^T = W1^T @ x^T  ->  (H, TB).  The x tile arrives untransposed
    #   (TB, S); contracting both minor dims (A @ B^T) avoids materializing
    #   x^T anywhere.  f32 accumulation regardless of input dtype.
    h = jax.lax.dot_general(
        w1t_ref[...], x_ref[...],
        dimension_numbers=(((1,), (1,)), ((), ())),
        preferred_element_type=jnp.float32)
    # Bias + ReLU in f32 on the VPU (b1 broadcast along the lane/batch axis).
    h = jnp.maximum(h + b1t_ref[...], 0.0)
    # fc2 (H -> 1) as a (1,H) @ (H,TB) MXU matmul: the MXU is otherwise nearly
    # idle (K = S = 4), and the result is already the lane-dense (1, TB) row
    # matching the output block.
    v = jnp.dot(w2t_ref[...], h, preferred_element_type=jnp.float32)
    o_ref[...] = (v + b2_ref[0, 0]).astype(o_ref.dtype)   # scalar bias from SMEM


def _round_up(n, m):
    return ((n + m - 1) // m) * m


_DEFAULT_TB = 4096   # x dbl-buf ~4 MiB + h ~2 MiB at H=128: big tile, small VMEM
_MAX_TB = 8192       # hard cap so a caller-supplied block_b cannot blow VMEM


def _choose_tb(B, block_b):
    """Batch tile (the lane axis of the kernel).

    Multiple of 128 and <= B (tiny batches < 128 use one full-extent block);
    as large as possible to amortize per-grid-step overhead; for large B, an
    even number of >= 2 grid steps so v7x megacore splits the work evenly.
    """
    if B < 128:
        return B
    lane_cap = (B // 128) * 128
    if block_b is not None:
        tb = _round_up(block_b, 128)               # keep lane dims 128-aligned
    elif B < 1024:
        tb = lane_cap                              # 1-2 tiles; splitting not worth it
    else:
        steps = max(2, 2 * pl.cdiv(B, 2 * _DEFAULT_TB))   # even step count
        tb = _round_up(pl.cdiv(B, steps), 128)
    return min(tb, _MAX_TB, lane_cap)


def value_net_forward(x, w1, b1, w2, b2, *, block_b=None, compute_dtype=None):
    """x: (B, S); w1: (S, H); b1: (1, H); w2: (H, 1); b2: (1, 1)  ->  (B, 1).

    compute_dtype=jnp.bfloat16 (recommended on v6e/v7x) casts only the
    streamed operands (x, W1); accumulation and post-matmul math stay f32.
    """
    B, S = x.shape
    H = w1.shape[1]
    out_dtype = x.dtype

    TB = _choose_tb(B, block_b)
    grid = (pl.cdiv(B, TB),)

    # Small one-time relayouts of the *resident* parameters only; x itself is
    # fed untransposed / unpadded (no extra HBM pass over the big operand).
    w1t = jnp.transpose(w1)                        # (H, S)
    b1t = jnp.reshape(b1, (H, 1)).astype(jnp.float32)
    w2t = jnp.reshape(w2, (1, H)).astype(jnp.float32)
    b2s = jnp.reshape(b2, (1, 1)).astype(jnp.float32)

    if compute_dtype is not None:
        x = x.astype(compute_dtype)
        w1t = w1t.astype(compute_dtype)

    flops = 2 * B * S * H + 2 * B * H + 3 * B
    bytes_accessed = (x.size * x.dtype.itemsize + w1t.size * w1t.dtype.itemsize
                      + 4 * (2 * H + 1) + B * jnp.dtype(out_dtype).itemsize)

    out_row = pl.pallas_call(
        value_net_kernel,
        out_shape=jax.ShapeDtypeStruct((1, B), out_dtype),
        grid=grid,
        in_specs=[
            pl.BlockSpec((TB, S), lambda i: (i, 0)),        # x tile (batch on sublanes)
            pl.BlockSpec((H, S), lambda i: (0, 0)),         # W1^T, resident
            pl.BlockSpec((H, 1), lambda i: (0, 0)),         # b1 column, resident
            pl.BlockSpec((1, H), lambda i: (0, 0)),         # w2^T row, resident
            pl.BlockSpec(memory_space=pltpu.MemorySpace.SMEM),  # b2 scalar
        ],
        out_specs=pl.BlockSpec((1, TB), lambda i: (0, i)),  # lane-dense value row
        compiler_params=pltpu.CompilerParams(
            dimension_semantics=("parallel",),   # shard batch tiles across TCs (v7x)
        ),
        cost_estimate=pl.CostEstimate(
            flops=int(flops), transcendentals=0, bytes_accessed=int(bytes_accessed)),
    )(x, w1t, b1t, w2t, b2s)

    # Restore the PyTorch (B, 1) shape.
    return jnp.reshape(out_row[0, :], (B, 1))


def init_params(key, state_dim, hidden_dim, dtype=jnp.float32):
    """Mimics torch.nn.Linear default init U(-1/sqrt(fan_in), 1/sqrt(fan_in))."""
    k1, k2, k3, k4 = jax.random.split(key, 4)
    bound1 = 1.0 / jnp.sqrt(state_dim)
    bound2 = 1.0 / jnp.sqrt(hidden_dim)
    # stored as (in_features, out_features), i.e. PyTorch weight transposed
    w1 = jax.random.uniform(k1, (state_dim, hidden_dim), dtype, -bound1, bound1)
    b1 = jax.random.uniform(k2, (1, hidden_dim), dtype, -bound1, bound1)
    w2 = jax.random.uniform(k3, (hidden_dim, 1), dtype, -bound2, bound2)
    b2 = jax.random.uniform(k4, (1, 1), dtype, -bound2, bound2)
    return w1, b1, w2, b2


def _ref_forward(x, w1, b1, w2, b2):
    return jnp.maximum(x @ w1 + b1, 0.0) @ w2 + b2


if __name__ == "__main__":
    # Small shapes consistent with the module (CartPole-like state_dim=4).
    batch = 8
    state_dim = 4
    hidden_dim = 128

    key = jax.random.PRNGKey(0)
    kx, kp = jax.random.split(key)
    x = jax.random.normal(kx, (batch, state_dim), jnp.float32)
    w1, b1, w2, b2 = init_params(kp, state_dim, hidden_dim)

    out = jax.block_until_ready(value_net_forward(x, w1, b1, w2, b2))
    ref = _ref_forward(x, w1, b1, w2, b2)
    assert out.shape == (batch, 1)
    assert jnp.allclose(out, ref, atol=1e-5, rtol=1e-5)

    # Multi-tile path: non-multiple-of-TB batch, no wrapper padding (partial
    # trailing block; its garbage lanes never reach the sliced (B, 1) result).
    x2 = jax.random.normal(jax.random.PRNGKey(1), (200, state_dim), jnp.float32)
    out2 = jax.block_until_ready(value_net_forward(x2, w1, b1, w2, b2, block_b=128))
    ref2 = _ref_forward(x2, w1, b1, w2, b2)
    assert out2.shape == (200, 1)
    assert jnp.allclose(out2, ref2, atol=1e-5, rtol=1e-5)

    # bf16-streamed path (v6e/v7x bandwidth optimization): x/W1 in bf16,
    # f32 accumulation; loose tolerance vs the f32 reference.
    x3 = jax.random.normal(jax.random.PRNGKey(2), (256, state_dim), jnp.float32)
    out3 = jax.block_until_ready(
        value_net_forward(x3, w1, b1, w2, b2, compute_dtype=jnp.bfloat16))
    ref3 = _ref_forward(x3, w1, b1, w2, b2)
    assert out3.shape == (256, 1)
    assert jnp.allclose(out3, ref3, atol=5e-2, rtol=5e-2)

    print("KERNEL_OK")
</pallas_src>

<mosaic_0001>
module attributes {stable_mosaic.version = 11 : i64} {
  func.func @value_net_kernel(%arg0: i32, %arg1: memref<8x4xf32, #tpu.memory_space<vmem>>, %arg2: memref<128x4xf32, #tpu.memory_space<vmem>>, %arg3: memref<128x1xf32, #tpu.memory_space<vmem>>, %arg4: memref<1x128xf32, #tpu.memory_space<vmem>>, %arg5: memref<1x1xf32, #tpu.memory_space<smem>>, %arg6: memref<1x8xf32, #tpu.memory_space<vmem>>) attributes {dimension_semantics = [#tpu.dimension_semantics<parallel>], iteration_bounds = array<i64: 1>, scalar_prefetch = 0 : i64, scratch_operands = 0 : i64, tpu.core_type = #tpu.core_type<tc>, window_params = [{transform_indices = @transform_0, window_bounds = array<i64: 8, 4>}, {pipeline_mode = #tpu.pipeline_mode<synchronous>, transform_indices = @transform_1, window_bounds = array<i64: 128, 4>}, {pipeline_mode = #tpu.pipeline_mode<synchronous>, transform_indices = @transform_2, window_bounds = array<i64: 128, 1>}, {pipeline_mode = #tpu.pipeline_mode<synchronous>, transform_indices = @transform_3, window_bounds = array<i64: 1, 128>}, {transform_indices = @transform_4, window_bounds = array<i64: 1, 1>}, {transform_indices = @transform_5, window_bounds = array<i64: 1, 8>}]} {
    %c0 = arith.constant 0 : index
    %c0_0 = arith.constant 0 : index
    %0 = vector.load %arg2[%c0, %c0_0] : memref<128x4xf32, #tpu.memory_space<vmem>>, vector<128x4xf32>
    %c0_1 = arith.constant 0 : index
    %c0_2 = arith.constant 0 : index
    %1 = vector.load %arg1[%c0_1, %c0_2] : memref<8x4xf32, #tpu.memory_space<vmem>>, vector<8x4xf32>
    %cst = arith.constant dense<0.000000e+00> : vector<128x8xf32>
    %2 = tpu.matmul %0, %1, %cst {dimension_numbers = #tpu.dot_dimension_numbers<[1], [1], [0], [0], [0, 0, 1, 0], [], []>} : vector<128x4xf32>, vector<8x4xf32>, vector<128x8xf32> -> vector<128x8xf32>
    %c0_3 = arith.constant 0 : index
    %c0_4 = arith.constant 0 : index
    %3 = vector.load %arg3[%c0_3, %c0_4] : memref<128x1xf32, #tpu.memory_space<vmem>>, vector<128x1xf32>
    %4 = vector.broadcast %3 : vector<128x1xf32> to vector<128x8xf32>
    %5 = arith.addf %2, %4 : vector<128x8xf32>
    %cst_5 = arith.constant 0.000000e+00 : f32
    %6 = vector.broadcast %cst_5 : f32 to vector<128x8xf32>
    %7 = arith.maximumf %5, %6 : vector<128x8xf32>
    %c0_6 = arith.constant 0 : index
    %c0_7 = arith.constant 0 : index
    %8 = vector.load %arg4[%c0_6, %c0_7] : memref<1x128xf32, #tpu.memory_space<vmem>>, vector<1x128xf32>
    %cst_8 = arith.constant dense<0.000000e+00> : vector<1x8xf32>
    %9 = tpu.matmul %8, %7, %cst_8 {dimension_numbers = #tpu.dot_dimension_numbers<[1], [0], [0], [1], [0, 0, 1, 1], [], []>} : vector<1x128xf32>, vector<128x8xf32>, vector<1x8xf32> -> vector<1x8xf32>
    %c0_9 = arith.constant 0 : index
    %c0_10 = arith.constant 0 : index
    %10 = memref.load %arg5[%c0_9, %c0_10] : memref<1x1xf32, #tpu.memory_space<smem>>
    %11 = vector.broadcast %10 : f32 to vector<1x8xf32>
    %12 = arith.addf %9, %11 : vector<1x8xf32>
    %c0_11 = arith.constant 0 : index
    %c0_12 = arith.constant 0 : index
    %13 = vector.load %arg6[%c0_11, %c0_12] : memref<1x8xf32, #tpu.memory_space<vmem>>, vector<1x8xf32>
    tpu.vector_store %arg6[%c0_11, %c0_12], %12 {strides = array<i32>} : memref<1x8xf32, #tpu.memory_space<vmem>>, vector<1x8xf32>,
    return
  }
  func.func @transform_0(%arg0: i32) -> (i32, i32) {
    %c0_i32 = arith.constant 0 : i32
    %c0_i32_0 = arith.constant 0 : i32
    return %arg0, %c0_i32 : i32, i32
  }
  func.func @transform_1(%arg0: i32) -> (i32, i32) {
    %c0_i32 = arith.constant 0 : i32
    %c0_i32_0 = arith.constant 0 : i32
    %c0_i32_1 = arith.constant 0 : i32
    return %c0_i32, %c0_i32_0 : i32, i32
  }
  func.func @transform_2(%arg0: i32) -> (i32, i32) {
    %c0_i32 = arith.constant 0 : i32
    %c0_i32_0 = arith.constant 0 : i32
    %c0_i32_1 = arith.constant 0 : i32
    return %c0_i32, %c0_i32_0 : i32, i32
  }
  func.func @transform_3(%arg0: i32) -> (i32, i32) {
    %c0_i32 = arith.constant 0 : i32
    %c0_i32_0 = arith.constant 0 : i32
    %c0_i32_1 = arith.constant 0 : i32
    return %c0_i32, %c0_i32_0 : i32, i32
  }
  func.func @transform_4(%arg0: i32) -> (i32, i32) {
    %c0_i32 = arith.constant 0 : i32
    %c0_i32_0 = arith.constant 0 : i32
    %c0_i32_1 = arith.constant 0 : i32
    return %c0_i32, %c0_i32_0 : i32, i32
  }
  func.func @transform_5(%arg0: i32) -> (i32, i32) {
    %c0_i32 = arith.constant 0 : i32
    %c0_i32_0 = arith.constant 0 : i32
    return %c0_i32, %arg0 : i32, i32
  }
}

</mosaic_0001>

<llo_original>
// kernel: tpu_custom_call.1
$region0: #{tpu_custom_call.1}
  #allocation0 [shape = 'u32[]', space=smem, size = 0x4, offset = 0x4, fixed_abs, tag = 'smem constant byte address 0x4 - core index']
  #allocation1 [shape = 'u32[72,128]{1,0:T(1,128)}', space=vmem, size = 0x9000, scoped, tag = 'internal scratch']
  #allocation2 [shape = 'f32[1,1]{1,0:T(1,128)S(6)}', space=smem, size = 0x200, scoped, tag = 'scoped memory for tpu_custom_call.1']
  %s0 = inlined_call_operand.vmem [shape: f32[8,4], index: 0, kind: input, shape index: {}]
  %s1 = inlined_call_operand.vmem [shape: f32[128,4], index: 1, kind: input, shape index: {}]
  %s2 = inlined_call_operand.vmem [shape: f32[128,1], index: 2, kind: input, shape index: {}]
  %s3 = inlined_call_operand.vmem [shape: f32[1,128], index: 3, kind: input, shape index: {}]
  %s4 = inlined_call_operand.<no memory space> [shape: f32[1,1], index: 4, kind: input, shape index: {}]
  %s5 = inlined_call_operand.hbm [shape: f32[1,8], index: 5, kind: output, shape index: {}]
  %s6 = sld [smem:[#allocation0]]
  $region30: #{tpu_custom_call.1} parent=0
    _
  %s8 = ssub.s32 1, %s6
  %s9 = scalar_select 0, %s8, %s6
  %10 = sst [smem:[#allocation2]] %s4
  $region1: #{tpu_custom_call.1} parent=0
    #allocation3 [shape = 'u8[512]{0}', space=vmem, size = 0x400, scoped, tag = 'output window, operand 0, single buffered']
    #allocation4 [shape = 's32[1]{0}', space=sflag, size = 0x4, scoped, tag = 'scoped memory for tpu_custom_call.1']
    %11 = vsyncpa [#allocation4], 0
    // Predicated region
    $region2: #{tpu_custom_call.1} parent=1 // pred_check
      _
    $region3: #{tpu_custom_call.1} parent=1 // pred_check_branch
      %13 = sbr.rel (0) target = $region5
    $region4: #{tpu_custom_call.1} parent=1 // pred_region
      _
    $region5: #{tpu_custom_call.1} parent=1 // pred_fallthru
      _
    // Predicated region
    $region6: #{tpu_custom_call.1} parent=1 // pred_check
      _
    $region7: #{tpu_custom_call.1} parent=1 // pred_check_branch
      %15 = sbr.rel (0) target = $region9
    $region8: #{tpu_custom_call.1} parent=1 // pred_region
      _
    $region9: #{tpu_custom_call.1} parent=1 // pred_fallthru
      _
    // Predicated region
    $region10: #{tpu_custom_call.1} parent=1 // pred_check
      _
    $region11: #{tpu_custom_call.1} parent=1 // pred_check_branch
      %17 = sbr.rel (0) target = $region13
    $region12: #{tpu_custom_call.1} parent=1 // pred_region
      _
    $region13: #{tpu_custom_call.1} parent=1 // pred_fallthru
      _
    // Predicated region
    $region14: #{tpu_custom_call.1} parent=1 // pred_check
      _
    $region15: #{tpu_custom_call.1} parent=1 // pred_check_branch
      %19 = sbr.rel (0) target = $region17
    $region16: #{tpu_custom_call.1} parent=1 // pred_region
      _
    $region17: #{tpu_custom_call.1} parent=1 // pred_fallthru
      _
    // Predicated region
    $region18: #{tpu_custom_call.1} parent=1 // pred_check
      _
    $region19: #{tpu_custom_call.1} parent=1 // pred_check_branch
      %21 = sbr.rel (0) target = $region21
    $region20: #{tpu_custom_call.1} parent=1 // pred_region
      _
    $region21: #{tpu_custom_call.1} parent=1 // pred_fallthru
      _
    %v22 = vld [vmem:[%s1] sm:$0xff]
    %v23 = vld [vmem:[%s1 + $0x8] sm:$0xff]
    %v24 = vld [vmem:[%s1 + $0x10] sm:$0xff]
    %v25 = vld [vmem:[%s1 + $0x18] sm:$0xff]
    %v26 = vld [vmem:[%s1 + $0x20] sm:$0xff]
    %v27 = vld [vmem:[%s1 + $0x28] sm:$0xff]
    %v28 = vld [vmem:[%s1 + $0x30] sm:$0xff]
    %v29 = vld [vmem:[%s1 + $0x38] sm:$0xff]
    %v30 = vld [vmem:[%s1 + $0x40] sm:$0xff]
    %v31 = vld [vmem:[%s1 + $0x48] sm:$0xff]
    %v32 = vld [vmem:[%s1 + $0x50] sm:$0xff]
    %v33 = vld [vmem:[%s1 + $0x58] sm:$0xff]
    %v34 = vld [vmem:[%s1 + $0x60] sm:$0xff]
    %v35 = vld [vmem:[%s1 + $0x68] sm:$0xff]
    %v36 = vld [vmem:[%s1 + $0x70] sm:$0xff]
    %v37 = vld [vmem:[%s1 + $0x78] sm:$0xff]
    %v38 = vld [vmem:[%s0] sm:$0xff]
    %v39 = vld [vmem:[%s2] sm:$0xff]
    %v40 = vld [vmem:[%s2 + $0x8] sm:$0xff]
    %v41 = vld [vmem:[%s2 + $0x10] sm:$0xff]
    %v42 = vld [vmem:[%s2 + $0x18] sm:$0xff]
    %v43 = vld [vmem:[%s2 + $0x20] sm:$0xff]
    %v44 = vld [vmem:[%s2 + $0x28] sm:$0xff]
    %v45 = vld [vmem:[%s2 + $0x30] sm:$0xff]
    %v46 = vld [vmem:[%s2 + $0x38] sm:$0xff]
    %v47 = vld [vmem:[%s2 + $0x40] sm:$0xff]
    %v48 = vld [vmem:[%s2 + $0x48] sm:$0xff]
    %v49 = vld [vmem:[%s2 + $0x50] sm:$0xff]
    %v50 = vld [vmem:[%s2 + $0x58] sm:$0xff]
    %v51 = vld [vmem:[%s2 + $0x60] sm:$0xff]
    %v52 = vld [vmem:[%s2 + $0x68] sm:$0xff]
    %v53 = vld [vmem:[%s2 + $0x70] sm:$0xff]
    %v54 = vld [vmem:[%s2 + $0x78] sm:$0xff]
    %56 = vset.pattern.permute.xlu0 0
    %57 = vperm.xlu0 %56, %v39
    %v58 = vpop.permute.xlu0 %57
    %61 = vset.pattern.permute.xlu0 0
    %62 = vperm.xlu0 %61, %v40
    %v63 = vpop.permute.xlu0 %62
    %66 = vset.pattern.permute.xlu0 0
    %67 = vperm.xlu0 %66, %v41
    %v68 = vpop.permute.xlu0 %67
    %71 = vset.pattern.permute.xlu0 0
    %72 = vperm.xlu0 %71, %v42
    %v73 = vpop.permute.xlu0 %72
    %76 = vset.pattern.permute.xlu0 0
    %77 = vperm.xlu0 %76, %v43
    %v78 = vpop.permute.xlu0 %77
    %81 = vset.pattern.permute.xlu0 0
    %82 = vperm.xlu0 %81, %v44
    %v83 = vpop.permute.xlu0 %82
    %86 = vset.pattern.permute.xlu0 0
    %87 = vperm.xlu0 %86, %v45
    %v88 = vpop.permute.xlu0 %87
    %91 = vset.pattern.permute.xlu0 0
    %92 = vperm.xlu0 %91, %v46
    %v93 = vpop.permute.xlu0 %92
    %96 = vset.pattern.permute.xlu0 0
    %97 = vperm.xlu0 %96, %v47
    %v98 = vpop.permute.xlu0 %97
    %101 = vset.pattern.permute.xlu0 0
    %102 = vperm.xlu0 %101, %v48
    %v103 = vpop.permute.xlu0 %102
    %106 = vset.pattern.permute.xlu0 0
    %107 = vperm.xlu0 %106, %v49
    %v108 = vpop.permute.xlu0 %107
    %111 = vset.pattern.permute.xlu0 0
    %112 = vperm.xlu0 %111, %v50
    %v113 = vpop.permute.xlu0 %112
    %116 = vset.pattern.permute.xlu0 0
    %117 = vperm.xlu0 %116, %v51
    %v118 = vpop.permute.xlu0 %117
    %121 = vset.pattern.permute.xlu0 0
    %122 = vperm.xlu0 %121, %v52
    %v123 = vpop.permute.xlu0 %122
    %126 = vset.pattern.permute.xlu0 0
    %127 = vperm.xlu0 %126, %v53
    %v128 = vpop.permute.xlu0 %127
    %131 = vset.pattern.permute.xlu0 0
    %132 = vperm.xlu0 %131, %v54
    %v133 = vpop.permute.xlu0 %132
    %vm135 = vcmask 31744
    %v137 = vsel %vm135, %v22, 0
    %v140 = vsel %vm135, %v23, 0
    %v143 = vsel %vm135, %v24, 0
    %v146 = vsel %vm135, %v25, 0
    %v149 = vsel %vm135, %v26, 0
    %v152 = vsel %vm135, %v27, 0
    %v155 = vsel %vm135, %v28, 0
    %v158 = vsel %vm135, %v29, 0
    %v161 = vsel %vm135, %v30, 0
    %v164 = vsel %vm135, %v31, 0
    %v167 = vsel %vm135, %v32, 0
    %v170 = vsel %vm135, %v33, 0
    %v173 = vsel %vm135, %v34, 0
    %v176 = vsel %vm135, %v35, 0
    %v179 = vsel %vm135, %v36, 0
    %v182 = vsel %vm135, %v37, 0
    %v185 = vsel %vm135, %v38, 0
    %187 = vmatpush.xpose.msra.mxu0 0.0
    %188 = vmatpush.xpose.msra.mxu0 0.0
    %189 = vmatpush.xpose.msra.mxu0 0.0
    %190 = vmatpush.xpose.msra.mxu0 0.0
    %191 = vmatpush.xpose.msra.mxu0 0.0
    %192 = vmatpush.xpose.msra.mxu0 0.0
    %193 = vmatpush.xpose.msra.mxu0 0.0
    %194 = vmatpush.xpose.msra.mxu0 0.0
    %195 = vmatpush.xpose.msra.mxu0 0.0
    %196 = vmatpush.xpose.msra.mxu0 0.0
    %197 = vmatpush.xpose.msra.mxu0 0.0
    %198 = vmatpush.xpose.msra.mxu0 0.0
    %199 = vmatpush.xpose.msra.mxu0 0.0
    %200 = vmatpush.xpose.msra.mxu0 0.0
    %201 = vmatpush.xpose.msra.mxu0 0.0
    %202 = vmatpush.xpose.msra.mxu0 %v185
    %203 = vmatmul.f32.gmra.mxu0 %v137
    %v204 = vpop.f32.mrf.mxu0
    %v205 = vadd.f32 %v58, %v204
    %206 = vmatmul.f32.gmra.mxu0 %v140
    %v207 = vpop.f32.mrf.mxu0
    %v208 = vadd.f32 %v63, %v207
    %209 = vmatmul.f32.gmra.mxu0 %v143
    %v210 = vpop.f32.mrf.mxu0
    %v211 = vadd.f32 %v68, %v210
    %212 = vmatmul.f32.gmra.mxu0 %v146
    %v213 = vpop.f32.mrf.mxu0
    %v214 = vadd.f32 %v73, %v213
    %215 = vmatmul.f32.gmra.mxu0 %v149
    %v216 = vpop.f32.mrf.mxu0
    %v217 = vadd.f32 %v78, %v216
    %218 = vmatmul.f32.gmra.mxu0 %v152
    %v219 = vpop.f32.mrf.mxu0
    %v220 = vadd.f32 %v83, %v219
    %221 = vmatmul.f32.gmra.mxu0 %v155
    %v222 = vpop.f32.mrf.mxu0
    %v223 = vadd.f32 %v88, %v222
    %224 = vmatmul.f32.gmra.mxu0 %v158
    %v225 = vpop.f32.mrf.mxu0
    %v226 = vadd.f32 %v93, %v225
    %227 = vmatmul.f32.gmra.mxu0 %v161
    %v228 = vpop.f32.mrf.mxu0
    %v229 = vadd.f32 %v98, %v228
    %230 = vmatmul.f32.gmra.mxu0 %v164
    %v231 = vpop.f32.mrf.mxu0
    %v232 = vadd.f32 %v103, %v231
    %233 = vmatmul.f32.gmra.mxu0 %v167
    %v234 = vpop.f32.mrf.mxu0
    %v235 = vadd.f32 %v108, %v234
    %236 = vmatmul.f32.gmra.mxu0 %v170
    %v237 = vpop.f32.mrf.mxu0
    %v238 = vadd.f32 %v113, %v237
    %239 = vmatmul.f32.gmra.mxu0 %v173
    %v240 = vpop.f32.mrf.mxu0
    %v241 = vadd.f32 %v118, %v240
    %242 = vmatmul.f32.gmra.mxu0 %v176
    %v243 = vpop.f32.mrf.mxu0
    %v244 = vadd.f32 %v123, %v243
    %245 = vmatmul.f32.gmra.mxu0 %v179
    %v246 = vpop.f32.mrf.mxu0
    %v247 = vadd.f32 %v128, %v246
    %248 = vmatmul.f32.gmra.mxu0 %v182
    %v249 = vpop.f32.mrf.mxu0
    %v250 = vadd.f32 %v133, %v249
    %251 = vdwg.mxu0
    %v252 = vmax.f32 %v205, 0.0
    %v253 = vmax.f32 %v208, 0.0
    %v254 = vmax.f32 %v211, 0.0
    %v255 = vmax.f32 %v214, 0.0
    %v256 = vmax.f32 %v217, 0.0
    %v257 = vmax.f32 %v220, 0.0
    %v258 = vmax.f32 %v223, 0.0
    %v259 = vmax.f32 %v226, 0.0
    %v260 = vmax.f32 %v229, 0.0
    %v261 = vmax.f32 %v232, 0.0
    %v262 = vmax.f32 %v235, 0.0
    %v263 = vmax.f32 %v238, 0.0
    %v264 = vmax.f32 %v241, 0.0
    %v265 = vmax.f32 %v244, 0.0
    %v266 = vmax.f32 %v247, 0.0
    %v267 = vmax.f32 %v250, 0.0
    %v268 = vld [vmem:[%s3] sm:$0x1]
    %s269 = sld [smem:[#allocation2]]
    %v270 = vstv %s269
    %271 = vmatpush.msra.mxu0 %v267
    %272 = vmatpush.msra.mxu0 %v266
    %273 = vmatpush.msra.mxu0 %v265
    %274 = vmatpush.msra.mxu0 %v264
    %275 = vmatpush.msra.mxu0 %v263
    %276 = vmatpush.msra.mxu0 %v262
    %277 = vmatpush.msra.mxu0 %v261
    %278 = vmatpush.msra.mxu0 %v260
    %279 = vmatpush.msra.mxu0 %v259
    %280 = vmatpush.msra.mxu0 %v258
    %281 = vmatpush.msra.mxu0 %v257
    %282 = vmatpush.msra.mxu0 %v256
    %283 = vmatpush.msra.mxu0 %v255
    %284 = vmatpush.msra.mxu0 %v254
    %285 = vmatpush.msra.mxu0 %v253
    %286 = vmatpush.msra.mxu0 %v252
    %287 = vmatmul.f32.gmra.mxu0 %v268
    %v288 = vpop.f32.mrf.mxu0
    %v289 = vadd.f32 %v270, %v288
    %290 = vdwg.mxu0
    %vm291 = vcmask 57344
    %292 = vst.msk [vmem:[#allocation3] sm:$0x1] %vm291, %v289
    // Predicated region
    $region22: #{tpu_custom_call.1} parent=1 // pred_check
      _
    $region23: #{tpu_custom_call.1} parent=1 // pred_check_branch
      %294 = sbr.rel (0) target = $region25
    $region24: #{tpu_custom_call.1} parent=1 // pred_region
      %296 = vsyncadd [#allocation4], 0
      %s298 = sshll.u32 [#allocation3], 4
      %s299 = int_to_ptr.vmem [resolvable:$true] %s298
      %s300 = sshll.u32 %s5, 4
      %s301 = int_to_ptr.hbm [resolvable:$true] %s300
      %303 = dma.vmem_to_hbm [thread:$0]  %s299, 16, %s301, [#allocation4]
    $region25: #{tpu_custom_call.1} parent=1 // pred_fallthru
      _
    // Predicated region
    $region26: #{tpu_custom_call.1} parent=1 // pred_check
      _
    $region27: #{tpu_custom_call.1} parent=1 // pred_check_branch
      %305 = sbr.rel (0) target = $region29
    $region28: #{tpu_custom_call.1} parent=1 // pred_region
      %307 = dma.done [#allocation4], 16
    $region29: #{tpu_custom_call.1} parent=1 // pred_fallthru
      _
    %308 = vsyncpa [#allocation4], 1

</llo_original>
